<compile_context>
chip_gen: v6e
topology: v6e:2x2x1
jax: 0.10.0
libtpu: 0.0.40
codegen_flags: <defaults>
</compile_context>

<pallas_src>
import jax
import jax.numpy as jnp
from jax.experimental import pallas as pl
from jax.experimental.pallas import tpu as pltpu


def _choose_tb(B, S, H, itemsize, target_bytes=4 << 20):
    """Batch rows per block: big enough to amortize per-grid-step overhead and
    keep the (TB, S) attn output sublane-dense (TB multiple of 8), small enough
    that double-buffered in/out blocks fit v7x's 64 MiB VMEM."""
    row_bytes = max(1, S * H * itemsize)
    max_rows = max(1, target_bytes // row_bytes)
    if B >= 16:
        max_rows = min(max_rows, B // 2)  # keep >= 2 grid steps (v7x has 2 TCs)
    if max_rows >= B:
        return B
    tb = (max_rows // 8) * 8
    while tb >= 8:
        if B % tb == 0:
            return tb
        tb -= 8
    # No sublane-dense divisor fits: fall back to the largest divisor of B that
    # fits the budget (masked attn stores, but VMEM stays bounded).
    tb = max(1, max_rows)
    while tb > 1 and B % tb != 0:
        tb -= 1
    return tb


def _choose_s_chunk(TB, S, H, budget_elems=32 * 1024):
    """In-kernel S-chunk size. CS divides S and is a multiple of 128 when
    chunking is active, so scratch loads/stores stay at 128-aligned lane
    offsets. CS == S when the whole block already fits the vreg budget."""
    if TB * S * H <= budget_elems or S % 128 != 0:
        return S
    target = max(128, budget_elems // (TB * H))
    cs = (target // 128) * 128
    while cs > 128 and S % cs != 0:
        cs -= 128
    return cs if S % cs == 0 else S


def _make_kernel(TB, S, H, CS):
    n_chunks = S // CS  # CS divides S by construction

    def kernel(x_ref, w_ref, b_ref, out_ref, attn_ref, attn_scratch):
        # x_ref:   (TB, S, H) VMEM      w_ref: (1, H) VMEM    b_ref: (1,) SMEM
        # out_ref: (TB, S, H) VMEM      attn_ref: (TB, S) VMEM
        # attn_scratch: (TB, S) f32 VMEM scratch (logits, then attn weights)
        bias = b_ref[0]                                       # SMEM scalar
        w = w_ref[...].astype(jnp.float32).reshape(1, 1, H)   # (1, 1, H)

        if n_chunks == 1:
            # Whole block fits comfortably in vregs: straight-line path.
            x = x_ref[...].astype(jnp.float32)                 # (TB, S, H)
            logits = jnp.sum(x * w, axis=-1) + bias            # (TB, S)
            m = jnp.max(logits, axis=-1, keepdims=True)
            e = jnp.exp(logits - m)
            denom = jnp.sum(e, axis=-1, keepdims=True)
            attn = e * pl.reciprocal(denom, approx=False)      # exact softmax
            attn_ref[...] = attn.astype(attn_ref.dtype)
            out_ref[...] = (attn[:, :, None] * x).astype(out_ref.dtype)
        else:
            # ---- Pass 1: logits, chunked along S (sublane dim of x) ----
            def logits_body(c, carry):
                s0 = pl.multiple_of(c * CS, CS)
                xc = x_ref[:, pl.ds(s0, CS), :].astype(jnp.float32)   # (TB,CS,H)
                attn_scratch[:, pl.ds(s0, CS)] = jnp.sum(xc * w, axis=-1) + bias
                return carry

            jax.lax.fori_loop(0, n_chunks, logits_body, 0,
                              unroll=n_chunks <= 8)

            # ---- Pass 2: softmax over S (small (TB, S) f32 slab) ----
            logits = attn_scratch[...]
            m = jnp.max(logits, axis=-1, keepdims=True)
            e = jnp.exp(logits - m)
            denom = jnp.sum(e, axis=-1, keepdims=True)
            attn = e * pl.reciprocal(denom, approx=False)
            attn_ref[...] = attn.astype(attn_ref.dtype)
            attn_scratch[...] = attn                           # keep f32 attn

            # ---- Pass 3: out = attn[..., None] * x, chunked along S ----
            def scale_body(c, carry):
                s0 = pl.multiple_of(c * CS, CS)
                xc = x_ref[:, pl.ds(s0, CS), :].astype(jnp.float32)   # (TB,CS,H)
                ac = attn_scratch[:, pl.ds(s0, CS)]                   # (TB,CS)
                out_ref[:, pl.ds(s0, CS), :] = (
                    ac[:, :, None] * xc).astype(out_ref.dtype)
                return carry

            jax.lax.fori_loop(0, n_chunks, scale_body, 0,
                              unroll=n_chunks <= 8)

    return kernel


def self_attention(x, weight, bias):
    """
    x:      (B, S, H)  -- input
    weight: (1, H)     -- nn.Linear(H, 1).weight
    bias:   (1,)       -- nn.Linear(H, 1).bias
    returns (out, attention_score) with shapes (B, S, H), (B, S)
    """
    B, S, H = x.shape
    itemsize = jnp.dtype(x.dtype).itemsize

    TB = _choose_tb(B, S, H, itemsize)
    CS = _choose_s_chunk(TB, S, H)
    n_blocks = B // TB

    block_bytes = TB * S * H * itemsize
    # ~2x double-buffered input + 2x output + attn blocks + f32 temps/scratch,
    # with headroom; stays under v7x's 64 MiB physical VMEM.
    vmem_limit = int(min(56 << 20, max(32 << 20, 6 * block_bytes + (8 << 20))))

    kernel = _make_kernel(TB, S, H, CS)

    out_shapes = (
        jax.ShapeDtypeStruct((B, S, H), x.dtype),
        jax.ShapeDtypeStruct((B, S), x.dtype),
    )

    return pl.pallas_call(
        kernel,
        out_shape=out_shapes,
        grid_spec=pltpu.PrefetchScalarGridSpec(
            num_scalar_prefetch=0,
            grid=(n_blocks,),
            in_specs=[
                pl.BlockSpec((TB, S, H), lambda i: (i, 0, 0)),   # x: TB rows
                pl.BlockSpec((1, H), lambda i: (0, 0)),          # weight (repl.)
                pl.BlockSpec(memory_space=pltpu.MemorySpace.SMEM),  # bias scalar
            ],
            out_specs=[
                pl.BlockSpec((TB, S, H), lambda i: (i, 0, 0)),   # out
                pl.BlockSpec((TB, S), lambda i: (i, 0)),         # attn (dense)
            ],
            scratch_shapes=[pltpu.VMEM((TB, S), jnp.float32)],
        ),
        compiler_params=pltpu.CompilerParams(
            dimension_semantics=("parallel",),
            vmem_limit_bytes=vmem_limit,
        ),
    )(x, weight, bias)


def _reference(x, weight, bias):
    # Pure-JAX reference mirroring the PyTorch forward.
    logits = jnp.einsum("bsh,oh->bso", x, weight) + bias      # (B, S, 1)
    logits = jnp.squeeze(logits, -1)                          # (B, S)
    attn = jax.nn.softmax(logits, axis=-1)                    # (B, S)
    out = attn[..., None] * x                                 # (B, S, H)
    return out, attn


if __name__ == "__main__":
    B, S, H = 2, 8, 32

    key = jax.random.PRNGKey(0)
    kx, kw, kb = jax.random.split(key, 3)

    x = jax.random.normal(kx, (B, S, H), dtype=jnp.float32)
    # Deterministic "Linear(H, 1)" parameters (synthetic init, no checkpoint).
    weight = jax.random.normal(kw, (1, H), dtype=jnp.float32) * 0.1
    bias = jax.random.normal(kb, (1,), dtype=jnp.float32) * 0.1

    out, attn = self_attention(x, weight, bias)
    out = jax.block_until_ready(out)
    attn = jax.block_until_ready(attn)

    out_ref, attn_ref = _reference(x, weight, bias)
    assert out.shape == (B, S, H) and attn.shape == (B, S)
    assert jnp.allclose(out, out_ref, atol=1e-5, rtol=1e-5)
    assert jnp.allclose(attn, attn_ref, atol=1e-5, rtol=1e-5)

    print("KERNEL_OK")
</pallas_src>

<mosaic_0001>
module attributes {stable_mosaic.version = 11 : i64} {
  func.func @kernel(%arg0: i32, %arg1: memref<2x8x32xf32, #tpu.memory_space<vmem>>, %arg2: memref<1x32xf32, #tpu.memory_space<vmem>>, %arg3: memref<1xf32, #tpu.memory_space<smem>>, %arg4: memref<2x8x32xf32, #tpu.memory_space<vmem>>, %arg5: memref<2x8xf32, #tpu.memory_space<vmem>>, %arg6: memref<2x8xf32, #tpu.memory_space<vmem>>) attributes {dimension_semantics = [#tpu.dimension_semantics<parallel>], iteration_bounds = array<i64: 1>, scalar_prefetch = 0 : i64, scratch_operands = 1 : i64, tpu.core_type = #tpu.core_type<tc>, window_params = [{transform_indices = @transform_0, window_bounds = array<i64: 2, 8, 32>}, {pipeline_mode = #tpu.pipeline_mode<synchronous>, transform_indices = @transform_1, window_bounds = array<i64: 1, 32>}, {transform_indices = @transform_2, window_bounds = array<i64: 1>}, {transform_indices = @transform_3, window_bounds = array<i64: 2, 8, 32>}, {transform_indices = @transform_4, window_bounds = array<i64: 2, 8>}]} {
    %c0 = arith.constant 0 : index
    %0 = memref.load %arg3[%c0] : memref<1xf32, #tpu.memory_space<smem>>
    %c0_0 = arith.constant 0 : index
    %c0_1 = arith.constant 0 : index
    %1 = vector.load %arg2[%c0_0, %c0_1] : memref<1x32xf32, #tpu.memory_space<vmem>>, vector<1x32xf32>
    %2 = vector.shape_cast %1 : vector<1x32xf32> to vector<1x1x32xf32>
    %c0_2 = arith.constant 0 : index
    %c0_3 = arith.constant 0 : index
    %c0_4 = arith.constant 0 : index
    %3 = vector.load %arg1[%c0_2, %c0_3, %c0_4] : memref<2x8x32xf32, #tpu.memory_space<vmem>>, vector<2x8x32xf32>
    %4 = vector.broadcast %2 : vector<1x1x32xf32> to vector<2x8x32xf32>
    %5 = arith.mulf %3, %4 : vector<2x8x32xf32>
    %cst = arith.constant dense<0.000000e+00> : vector<2x8xf32>
    %6 = vector.multi_reduction <add>, %5, %cst [2] : vector<2x8x32xf32> to vector<2x8xf32>
    %7 = vector.broadcast %0 : f32 to vector<2x8xf32>
    %8 = arith.addf %6, %7 : vector<2x8xf32>
    %cst_5 = arith.constant dense<0xFF800000> : vector<2xf32>
    %9 = vector.multi_reduction <maximumf>, %8, %cst_5 [1] : vector<2x8xf32> to vector<2xf32>
    %10 = vector.shape_cast %9 : vector<2xf32> to vector<2x1xf32>
    %11 = vector.broadcast %10 : vector<2x1xf32> to vector<2x8xf32>
    %12 = arith.subf %8, %11 : vector<2x8xf32>
    %13 = math.exp %12 : vector<2x8xf32>
    %cst_6 = arith.constant dense<0.000000e+00> : vector<2xf32>
    %14 = vector.multi_reduction <add>, %13, %cst_6 [1] : vector<2x8xf32> to vector<2xf32>
    %15 = vector.shape_cast %14 : vector<2xf32> to vector<2x1xf32>
    %16 = tpu.reciprocal %15 : vector<2x1xf32> -> vector<2x1xf32>
    %17 = vector.broadcast %16 : vector<2x1xf32> to vector<2x8xf32>
    %18 = arith.mulf %13, %17 : vector<2x8xf32>
    %c0_7 = arith.constant 0 : index
    %c0_8 = arith.constant 0 : index
    %19 = vector.load %arg5[%c0_7, %c0_8] : memref<2x8xf32, #tpu.memory_space<vmem>>, vector<2x8xf32>
    tpu.vector_store %arg5[%c0_7, %c0_8], %18 {strides = array<i32>} : memref<2x8xf32, #tpu.memory_space<vmem>>, vector<2x8xf32>,
    %20 = vector.shape_cast %18 : vector<2x8xf32> to vector<2x8x1xf32>
    %21 = vector.broadcast %20 : vector<2x8x1xf32> to vector<2x8x32xf32>
    %22 = arith.mulf %21, %3 : vector<2x8x32xf32>
    %c0_9 = arith.constant 0 : index
    %c0_10 = arith.constant 0 : index
    %c0_11 = arith.constant 0 : index
    %23 = vector.load %arg4[%c0_9, %c0_10, %c0_11] : memref<2x8x32xf32, #tpu.memory_space<vmem>>, vector<2x8x32xf32>
    tpu.vector_store %arg4[%c0_9, %c0_10, %c0_11], %22 {strides = array<i32>} : memref<2x8x32xf32, #tpu.memory_space<vmem>>, vector<2x8x32xf32>,
    return
  }
  func.func @transform_0(%arg0: i32) -> (i32, i32, i32) {
    %c0_i32 = arith.constant 0 : i32
    %c0_i32_0 = arith.constant 0 : i32
    %c0_i32_1 = arith.constant 0 : i32
    return %arg0, %c0_i32, %c0_i32_0 : i32, i32, i32
  }
  func.func @transform_1(%arg0: i32) -> (i32, i32) {
    %c0_i32 = arith.constant 0 : i32
    %c0_i32_0 = arith.constant 0 : i32
    %c0_i32_1 = arith.constant 0 : i32
    return %c0_i32, %c0_i32_0 : i32, i32
  }
  func.func @transform_2(%arg0: i32) -> i32 {
    %c0_i32 = arith.constant 0 : i32
    %c0_i32_0 = arith.constant 0 : i32
    return %c0_i32 : i32
  }
  func.func @transform_3(%arg0: i32) -> (i32, i32, i32) {
    %c0_i32 = arith.constant 0 : i32
    %c0_i32_0 = arith.constant 0 : i32
    %c0_i32_1 = arith.constant 0 : i32
    return %arg0, %c0_i32, %c0_i32_0 : i32, i32, i32
  }
  func.func @transform_4(%arg0: i32) -> (i32, i32) {
    %c0_i32 = arith.constant 0 : i32
    %c0_i32_0 = arith.constant 0 : i32
    return %arg0, %c0_i32 : i32, i32
  }
}

</mosaic_0001>

<llo_original>
// kernel: tpu_custom_call.1
$region0: #{tpu_custom_call.1}
  #allocation0 [shape = 'u32[]', space=smem, size = 0x4, offset = 0x4, fixed_abs, tag = 'smem constant byte address 0x4 - core index']
  #allocation1 [shape = 'u32[144,128]{1,0:T(1,128)}', space=vmem, size = 0x12000, scoped, tag = 'internal scratch']
  #allocation2 [shape = 'f32[2,8]{1,0:T(2,128)}', space=vmem, size = 0x400, scoped, tag = 'scratch operand']
  #allocation3 [shape = 'f32[1]{0:T(128)S(6)}', space=smem, size = 0x200, scoped, tag = 'scoped memory for tpu_custom_call.1']
  %s0 = inlined_call_operand.hbm [shape: f32[2,8,32], index: 0, kind: input, shape index: {}]
  %s1 = inlined_call_operand.vmem [shape: f32[1,32], index: 1, kind: input, shape index: {}]
  %s2 = inlined_call_operand.<no memory space> [shape: f32[1], index: 2, kind: input, shape index: {}]
  %s3 = inlined_call_operand.hbm [shape: f32[2,8,32], index: 3, kind: output, shape index: {0}]
  %s4 = inlined_call_operand.hbm [shape: f32[2,8], index: 4, kind: output, shape index: {1}]
  %5 = xla_tuple %s3, %s4
  %s6 = sld [smem:[#allocation0]]
  $region34: #{tpu_custom_call.1} parent=0
    _
  %s8 = ssub.s32 1, %s6
  %s9 = scalar_select 0, %s8, %s6
  %10 = sst [smem:[#allocation3]] %s2
  $region1: #{tpu_custom_call.1} parent=0
    #allocation4 [shape = 'u8[8192]{0}', space=vmem, size = 0x2000, scoped, tag = 'input window, operand 0, single buffered']
    #allocation5 [shape = 's32[1]{0}', space=sflag, size = 0x4, scoped, tag = 'scoped memory for tpu_custom_call.1']
    #allocation6 [shape = 's32[1]{0}', space=sflag, size = 0x4, scoped, tag = 'scoped memory for tpu_custom_call.1']
    #allocation7 [shape = 'u8[8192]{0}', space=vmem, size = 0x2000, scoped, tag = 'output window, operand 0, single buffered']
    #allocation8 [shape = 'u8[1024]{0}', space=vmem, size = 0x400, scoped, tag = 'output window, operand 1, single buffered']
    #allocation9 [shape = 's32[1]{0}', space=sflag, size = 0x4, scoped, tag = 'scoped memory for tpu_custom_call.1']
    %11 = vsyncpa [#allocation5], 0
    %12 = vsyncpa [#allocation6], 0
    %13 = vsyncpa [#allocation9], 0
    // Predicated region
    $region2: #{tpu_custom_call.1} parent=1 // pred_check
      _
    $region3: #{tpu_custom_call.1} parent=1 // pred_check_branch
      %15 = sbr.rel (0) target = $region5
    $region4: #{tpu_custom_call.1} parent=1 // pred_region
      %s17 = ssub.s32 256, 256
      %18 = vsyncadd [#allocation5], %s17
      %s19 = sshll.u32 [#allocation4], 4
      %s20 = int_to_ptr.vmem [resolvable:$true] %s19
      %25 = dma.hbm_to_vmem [thread:$0]  %s0, 256, %s20, [#allocation5], 128, 128, 8
    $region5: #{tpu_custom_call.1} parent=1 // pred_fallthru
      _
    // Predicated region
    $region6: #{tpu_custom_call.1} parent=1 // pred_check
      _
    $region7: #{tpu_custom_call.1} parent=1 // pred_check_branch
      %27 = sbr.rel (0) target = $region9
    $region8: #{tpu_custom_call.1} parent=1 // pred_region
      _
    $region9: #{tpu_custom_call.1} parent=1 // pred_fallthru
      _
    // Predicated region
    $region10: #{tpu_custom_call.1} parent=1 // pred_check
      _
    $region11: #{tpu_custom_call.1} parent=1 // pred_check_branch
      %29 = sbr.rel (0) target = $region13
    $region12: #{tpu_custom_call.1} parent=1 // pred_region
      _
    $region13: #{tpu_custom_call.1} parent=1 // pred_fallthru
      _
    // Predicated region
    $region14: #{tpu_custom_call.1} parent=1 // pred_check
      _
    $region15: #{tpu_custom_call.1} parent=1 // pred_check_branch
      %31 = sbr.rel (0) target = $region17
    $region16: #{tpu_custom_call.1} parent=1 // pred_region
      %32 = dma.done [#allocation5], 256
    $region17: #{tpu_custom_call.1} parent=1 // pred_fallthru
      _
    %s33 = sld [smem:[#allocation3]]
    %v34 = vld [vmem:[%s1] sm:$0x1]
    %v35 = vld [vmem:[#allocation4] sm:$0xff]
    %v36 = vld [vmem:[#allocation4 + $0x8] sm:$0xff]
    %v38 = vlaneseq
    %v39 = vshrl.u32 %v38, 7
    %v40 = vsub.s32 0, %v39
    %v41 = vrot.slane %v34, %v40
    %v43 = vmul.f32 %v35, %v41
    %v44 = vmul.f32 %v36, %v41
    %vm45 = vcmask 261120
    %v46 = vsel %vm45, %v43, 0.0
    %47 = vadd.xlane.f32.xlu0 %v46
    %v48 = vpop.xlane.xlu0 %47
    %v49 = vsel %vm45, %v44, 0.0
    %50 = vadd.xlane.f32.xlu0 %v49
    %v51 = vpop.xlane.xlu0 %50
    %v52 = vstv %s33
    %v53 = vadd.f32 %v48, %v52
    %v54 = vadd.f32 %v51, %v52
    %v57 = vlaneseq
    %v58 = vand.u32 %v57, 127
    %v59 = vlaneseq
    %v60 = vshrl.u32 %v59, 7
    %v61 = vsub.s32 %v58, %v60
    %v62 = vrot.slane %v53, %v61
    %v63 = vlaneseq
    %v64 = vshrl.u32 %v63, 7
    %v65 = vsub.s32 %v58, %v64
    %v66 = vrot.slane %v54, %v65
    %vm67 = vcmask 1041409
    %v68 = vsel %vm67, %v66, %v62
    %vm70 = vcmask 58368
    %v71 = vsel %vm70, %v68, -inf
    %72 = vmax.xlane.f32.xlu0 %v71
    %v73 = vpop.xlane.xlu0 %72
    %v75 = vlaneseq
    %v76 = vshrl.u32 %v75, 7
    %v77 = vsub.s32 0, %v76
    %v78 = vrot.slane %v73, %v77
    %v79 = vlaneseq
    %v80 = vshrl.u32 %v79, 7
    %v81 = vsub.s32 1, %v80
    %v82 = vrot.slane %v73, %v81
    %v85 = vsub.f32 %v53, %v78
    %v86 = vsub.f32 %v54, %v82
    %v87 = vmul.f32 %v85, 1.442695
    %v88 = vpow.pop %v87
    %v89 = vmul.f32 %v86, 1.442695
    %v90 = vpow.pop %v89
    %93 = vset.pattern.permute.xlu0 0
    %94 = vperm.xlu0 %93, %v88
    %v95 = vpop.permute.xlu0 %94
    %96 = vset.pattern.permute.xlu0 0
    %97 = vperm.xlu0 %96, %v90
    %v98 = vpop.permute.xlu0 %97
    %v99 = vlaneseq
    %v100 = vshrl.u32 %v99, 7
    %v101 = vsub.s32 %v58, %v100
    %v102 = vrot.slane %v95, %v101
    %v103 = vlaneseq
    %v104 = vshrl.u32 %v103, 7
    %v105 = vsub.s32 %v58, %v104
    %v106 = vrot.slane %v98, %v105
    %v107 = vsel %vm67, %v106, %v102
    %v109 = vsel %vm70, %v107, 0.0
    %110 = vadd.xlane.f32.xlu0 %v109
    %v111 = vpop.xlane.xlu0 %110
    %v112 = vrcp.pop %v111
    %v114 = vlaneseq
    %v115 = vshrl.u32 %v114, 7
    %v116 = vsub.s32 0, %v115
    %v117 = vrot.slane %v112, %v116
    %v118 = vlaneseq
    %v119 = vshrl.u32 %v118, 7
    %v120 = vsub.s32 1, %v119
    %v121 = vrot.slane %v112, %v120
    %v124 = vmul.f32 %v88, %v117
    %v125 = vmul.f32 %v90, %v121
    %128 = vset.pattern.permute.xlu0 0
    %129 = vperm.xlu0 %128, %v124
    %v130 = vpop.permute.xlu0 %129
    %131 = vset.pattern.permute.xlu0 0
    %132 = vperm.xlu0 %131, %v125
    %v133 = vpop.permute.xlu0 %132
    %v134 = vlaneseq
    %v135 = vshrl.u32 %v134, 7
    %v136 = vsub.s32 %v58, %v135
    %v137 = vrot.slane %v130, %v136
    %v138 = vlaneseq
    %v139 = vshrl.u32 %v138, 7
    %v140 = vsub.s32 %v58, %v139
    %v141 = vrot.slane %v133, %v140
    %v142 = vsel %vm67, %v141, %v137
    %144 = vst.msk [vmem:[#allocation8] sm:$0x3] %vm70, %v142
    %v147 = vmul.f32 %v130, %v35
    %v148 = vmul.f32 %v133, %v36
    %149 = vst.msk [vmem:[#allocation7] sm:$0xff] %vm45, %v147
    %150 = vst.msk [vmem:[#allocation7 + $0x8] sm:$0xff] %vm45, %v148
    // Predicated region
    $region18: #{tpu_custom_call.1} parent=1 // pred_check
      _
    $region19: #{tpu_custom_call.1} parent=1 // pred_check_branch
      %152 = sbr.rel (0) target = $region21
    $region20: #{tpu_custom_call.1} parent=1 // pred_region
      %s154 = ssub.s32 256, 256
      %155 = vsyncadd [#allocation6], %s154
      %s156 = sshll.u32 [#allocation7], 4
      %s157 = int_to_ptr.vmem [resolvable:$true] %s156
      %162 = dma.vmem_to_hbm [thread:$0]  %s157, 256, %s3, [#allocation6], 128, 128, 8
    $region21: #{tpu_custom_call.1} parent=1 // pred_fallthru
      _
    // Predicated region
    $region22: #{tpu_custom_call.1} parent=1 // pred_check
      _
    $region23: #{tpu_custom_call.1} parent=1 // pred_check_branch
      %164 = sbr.rel (0) target = $region25
    $region24: #{tpu_custom_call.1} parent=1 // pred_region
      %s166 = ssub.s32 32, 32
      %167 = vsyncadd [#allocation9], %s166
      %s169 = sshll.u32 [#allocation8], 4
      %s170 = int_to_ptr.vmem [resolvable:$true] %s169
      %172 = dma.vmem_to_hbm [thread:$0]  %s170, 32, %s4, [#allocation9]
    $region25: #{tpu_custom_call.1} parent=1 // pred_fallthru
      _
    // Predicated region
    $region26: #{tpu_custom_call.1} parent=1 // pred_check
      _
    $region27: #{tpu_custom_call.1} parent=1 // pred_check_branch
      %174 = sbr.rel (0) target = $region29
    $region28: #{tpu_custom_call.1} parent=1 // pred_region
      %175 = dma.done [#allocation6], 256
    $region29: #{tpu_custom_call.1} parent=1 // pred_fallthru
      _
    // Predicated region
    $region30: #{tpu_custom_call.1} parent=1 // pred_check
      _
    $region31: #{tpu_custom_call.1} parent=1 // pred_check_branch
      %177 = sbr.rel (0) target = $region33
    $region32: #{tpu_custom_call.1} parent=1 // pred_region
      %178 = dma.done [#allocation9], 32
    $region33: #{tpu_custom_call.1} parent=1 // pred_fallthru
      _
    %179 = vsyncpa [#allocation5], 1
    %180 = vsyncpa [#allocation6], 1
    %181 = vsyncpa [#allocation9], 1

</llo_original>
